<compile_context>
chip_gen: v7x
topology: tpu7x:2x2x1
jax: 0.10.0
libtpu: 0.0.40
codegen_flags: <defaults>
</compile_context>

<pallas_src>
import math

import jax
import jax.numpy as jnp
from jax.experimental import pallas as pl
from jax.experimental.pallas import tpu as pltpu


def _swish_beta_kernel(x_ref, w_ref, o_ref):
    # x_ref: (tile, C_p) streamed VMEM tile; w_ref: (C_p, C_p) VMEM-resident
    # block-diagonal W^T (constant index_map -> fetched once).
    x = x_ref[...]
    # beta(x): MXU matmul with f32 accumulation.
    z = jnp.dot(x, w_ref[...], preferred_element_type=jnp.float32)
    # sigmoid(z) == 0.5 * (tanh(z/2) + 1): rides the otherwise-idle EUP slot
    # instead of a multi-op VALU divide; matches (1 + exp(-z))^-1 to ~1 ulp.
    sig = 0.5 * jnp.tanh(0.5 * z) + 0.5
    # Keep the tail multiply in f32 and cast exactly once at the store.
    o_ref[...] = (x.astype(jnp.float32) * sig).astype(o_ref.dtype)


def swish_beta(x, weight, *, tile_rows=4096):
    """x: (..., in_channels); weight: (out_channels, in_channels) like nn.Linear."""
    orig_shape = x.shape
    c_in = orig_shape[-1]
    c_out, c_in_w = weight.shape
    assert c_in_w == c_in, "weight must be (out_channels, in_channels)"
    assert c_out == c_in, "x * sigmoid(beta(x)) requires out_channels == in_channels"

    m = math.prod(orig_shape[:-1]) if len(orig_shape) > 1 else 1
    x2d = x.reshape(m, c_in)
    # Match the matmul operand dtype to x (bf16 in -> bf16 MXU passes).
    w_t = jnp.transpose(weight).astype(x.dtype)  # (c_in, c_out)

    # Lane packing: fold `pack` consecutive rows into the 128-lane axis so that
    # loads, VPU work and stores are lane-dense when C < 128.
    if c_in < 128 and 128 % c_in == 0:
        pack = 128 // c_in
    else:
        # TODO(synk): channel counts that don't divide 128 fall back to a
        # lane-sparse layout (masked stores); pad/rearrange channels if such
        # shapes ever matter.
        pack = 1

    # Pad only to a multiple of `pack` (rare); never to a full grid multiple.
    m_pad = m
    if pack > 1 and m % pack != 0:
        m_pad = ((m + pack - 1) // pack) * pack
        x2d = jnp.pad(x2d, ((0, m_pad - m), (0, 0)))

    c_p = c_in * pack
    # Block-diagonal weight: x_packed @ kron(I_pack, W^T) reproduces the
    # per-row (C x C) matmul exactly for each lane group.
    w_p = jnp.kron(jnp.eye(pack, dtype=w_t.dtype), w_t) if pack > 1 else w_t

    m_rows = m_pad // pack
    # Row-major (m_pad, c_in) -> (m_rows, c_p) is a pure re-view.
    x_p = x2d.reshape(m_rows, c_p)

    # ---- Tile selection --------------------------------------------------
    # Enforce the (8, 128) block constraint on user-provided tile_rows.
    tile_rows = max(8, (int(tile_rows) // 8) * 8)
    min_steps = 4  # >=2 for v7x megacore, >=2-3 for DMA/compute overlap
    if m_rows <= 8 * min_steps:
        # Tiny input: single full-extent block (full dim is always legal).
        tile = m_rows
    else:
        # Aim for at least `min_steps` grid steps, capped at tile_rows.
        target = (m_rows + min_steps - 1) // min_steps
        target = ((target + 7) // 8) * 8
        tile = min(tile_rows, target)
    grid_m = pl.cdiv(m_rows, tile)  # ragged last block is masked by Pallas

    itemsize = jnp.dtype(x.dtype).itemsize
    cost = pl.CostEstimate(
        flops=int(2 * m_rows * c_p * c_p),
        transcendentals=int(m_rows * c_p),
        bytes_accessed=int(itemsize * 2 * m_rows * c_p
                           + jnp.dtype(w_p.dtype).itemsize * c_p * c_p),
    )

    out_p = pl.pallas_call(
        _swish_beta_kernel,
        out_shape=jax.ShapeDtypeStruct((m_rows, c_p), x.dtype),
        grid_spec=pltpu.PrefetchScalarGridSpec(
            num_scalar_prefetch=0,
            grid=(grid_m,),
            in_specs=[
                pl.BlockSpec((tile, c_p), lambda i: (i, 0)),   # streamed x tiles
                pl.BlockSpec((c_p, c_p), lambda i: (0, 0)),    # weight stays resident
            ],
            out_specs=pl.BlockSpec((tile, c_p), lambda i: (i, 0)),
        ),
        compiler_params=pltpu.CompilerParams(
            # Independent M tiles -> megacore sharding on v7x.
            dimension_semantics=("parallel",),
            # Headroom for larger tile_rows; within every generation's budget
            # (v5e/v6e default 16/32 MiB scoped, v7x 64 MiB physical per TC).
            vmem_limit_bytes=32 * 1024 * 1024,
        ),
        cost_estimate=cost,
    )(x_p, w_p)

    out = out_p.reshape(m_pad, c_in)
    if m_pad != m:
        out = out[:m]
    return out.reshape(orig_shape[:-1] + (c_out,))


def swish_beta_ref(x, weight):
    z = jnp.einsum("...i,oi->...o", x, weight)
    return x * (1.0 / (1.0 + jnp.exp(-z)))


if __name__ == "__main__":
    key = jax.random.PRNGKey(0)
    batch, seq, channels = 2, 8, 32  # in_channels == out_channels == 32
    # Round inputs to bf16-representable values so the check is insensitive to
    # the MXU's matmul precision mode (kernel vs. XLA reference).
    x = jax.random.normal(key, (batch, seq, channels), dtype=jnp.float32)
    x = x.astype(jnp.bfloat16).astype(jnp.float32)

    # Deterministic parameter init matching nn.init.ones_(self.beta.weight).
    weight = jnp.ones((channels, channels), dtype=jnp.float32)

    y = jax.block_until_ready(swish_beta(x, weight))
    y_ref = swish_beta_ref(x, weight)

    assert y.shape == y_ref.shape
    assert jnp.allclose(y, y_ref, atol=1e-4, rtol=1e-4), "mismatch vs reference"

    print("KERNEL_OK")
</pallas_src>

<mosaic_0001>
module attributes {stable_mosaic.version = 11 : i64} {
  func.func @_swish_beta_kernel(%arg0: i32, %arg1: memref<4x128xf32, #tpu.memory_space<vmem>>, %arg2: memref<128x128xf32, #tpu.memory_space<vmem>>, %arg3: memref<4x128xf32, #tpu.memory_space<vmem>>) attributes {dimension_semantics = [#tpu.dimension_semantics<parallel>], iteration_bounds = array<i64: 1>, scalar_prefetch = 0 : i64, scratch_operands = 0 : i64, tpu.core_type = #tpu.core_type<tc>, window_params = [{transform_indices = @transform_0, window_bounds = array<i64: 4, 128>}, {pipeline_mode = #tpu.pipeline_mode<synchronous>, transform_indices = @transform_1, window_bounds = array<i64: 128, 128>}, {transform_indices = @transform_2, window_bounds = array<i64: 4, 128>}]} {
    %c0 = arith.constant 0 : index
    %c0_0 = arith.constant 0 : index
    %0 = vector.load %arg1[%c0, %c0_0] : memref<4x128xf32, #tpu.memory_space<vmem>>, vector<4x128xf32>
    %c0_1 = arith.constant 0 : index
    %c0_2 = arith.constant 0 : index
    %1 = vector.load %arg2[%c0_1, %c0_2] : memref<128x128xf32, #tpu.memory_space<vmem>>, vector<128x128xf32>
    %cst = arith.constant dense<0.000000e+00> : vector<4x128xf32>
    %2 = tpu.matmul %0, %1, %cst {dimension_numbers = #tpu.dot_dimension_numbers<[1], [0], [0], [1], [0, 0, 1, 1], [], []>} : vector<4x128xf32>, vector<128x128xf32>, vector<4x128xf32> -> vector<4x128xf32>
    %cst_3 = arith.constant 5.000000e-01 : f32
    %3 = vector.broadcast %cst_3 : f32 to vector<4x128xf32>
    %4 = arith.mulf %3, %2 : vector<4x128xf32>
    %5 = math.tanh %4 : vector<4x128xf32>
    %cst_4 = arith.constant 5.000000e-01 : f32
    %6 = vector.broadcast %cst_4 : f32 to vector<4x128xf32>
    %7 = arith.mulf %6, %5 : vector<4x128xf32>
    %cst_5 = arith.constant 5.000000e-01 : f32
    %8 = vector.broadcast %cst_5 : f32 to vector<4x128xf32>
    %9 = arith.addf %7, %8 : vector<4x128xf32>
    %10 = arith.mulf %0, %9 : vector<4x128xf32>
    %c0_6 = arith.constant 0 : index
    %c0_7 = arith.constant 0 : index
    %11 = vector.load %arg3[%c0_6, %c0_7] : memref<4x128xf32, #tpu.memory_space<vmem>>, vector<4x128xf32>
    tpu.vector_store %arg3[%c0_6, %c0_7], %10 {strides = array<i32>} : memref<4x128xf32, #tpu.memory_space<vmem>>, vector<4x128xf32>,
    return
  }
  func.func @transform_0(%arg0: i32) -> (i32, i32) {
    %c0_i32 = arith.constant 0 : i32
    %c0_i32_0 = arith.constant 0 : i32
    return %arg0, %c0_i32 : i32, i32
  }
  func.func @transform_1(%arg0: i32) -> (i32, i32) {
    %c0_i32 = arith.constant 0 : i32
    %c0_i32_0 = arith.constant 0 : i32
    %c0_i32_1 = arith.constant 0 : i32
    return %c0_i32, %c0_i32_0 : i32, i32
  }
  func.func @transform_2(%arg0: i32) -> (i32, i32) {
    %c0_i32 = arith.constant 0 : i32
    %c0_i32_0 = arith.constant 0 : i32
    return %arg0, %c0_i32 : i32, i32
  }
}

</mosaic_0001>

<llo_original>
// kernel: tpu_custom_call.1
$region0: #{tpu_custom_call.1}
  #allocation0 [shape = 'u32[]', space=smem, size = 0x4, offset = 0x4, fixed_abs, tag = 'smem constant byte address 0x4 - core index']
  #allocation1 [shape = 'u32[144,128]{1,0:T(1,128)}', space=vmem, size = 0x12000, scoped, tag = 'internal scratch']
  %s0 = inlined_call_operand.hbm [shape: f32[4,128], index: 0, kind: input, shape index: {}]
  %s1 = inlined_call_operand.hbm [shape: f32[128,128], index: 1, kind: input, shape index: {}]
  %s2 = inlined_call_operand.hbm [shape: f32[4,128], index: 2, kind: output, shape index: {}]
  %s3 = sld [smem:[#allocation0]]
  $region26: #{tpu_custom_call.1} parent=0
    _
  %s5 = ssub.s32 1, %s3
  %s6 = scalar_select 0, %s5, %s3
  $region1: #{tpu_custom_call.1} parent=0
    #allocation2 [shape = 'u8[2048]{0}', space=vmem, size = 0x800, scoped, tag = 'input window, operand 0, single buffered']
    #allocation3 [shape = 's32[1]{0}', space=sflag, size = 0x4, scoped, tag = 'scoped memory for tpu_custom_call.1']
    #allocation4 [shape = 's32[1]{0}', space=sflag, size = 0x4, scoped, tag = 'scoped memory for tpu_custom_call.1']
    #allocation5 [shape = 'u8[65536]{0}', space=vmem, size = 0x10000, scoped, tag = 'input window, operand 1, single buffered']
    #allocation6 [shape = 's32[1]{0}', space=sflag, size = 0x4, scoped, tag = 'scoped memory for tpu_custom_call.1']
    #allocation7 [shape = 'u8[2048]{0}', space=vmem, size = 0x800, scoped, tag = 'output window, operand 0, single buffered']
    %7 = vsyncpa [#allocation3], 0
    %8 = vsyncpa [#allocation6], 0
    %9 = vsyncpa [#allocation4], 0
    // Predicated region
    $region2: #{tpu_custom_call.1} parent=1 // pred_check
      _
    $region3: #{tpu_custom_call.1} parent=1 // pred_check_branch
      %11 = sbr.rel (0) target = $region5
    $region4: #{tpu_custom_call.1} parent=1 // pred_region
      %s13 = ssub.s32 64, 64
      %14 = vsyncadd [#allocation3], %s13
      %s16 = sshll.u32 [#allocation2], 4
      %s17 = int_to_ptr.vmem [resolvable:$true] %s16
      %19 = dma.hbm_to_vmem [thread:$0]  %s0, 64, %s17, [#allocation3]
    $region5: #{tpu_custom_call.1} parent=1 // pred_fallthru
      _
    // Predicated region
    $region6: #{tpu_custom_call.1} parent=1 // pred_check
      _
    $region7: #{tpu_custom_call.1} parent=1 // pred_check_branch
      %21 = sbr.rel (0) target = $region9
    $region8: #{tpu_custom_call.1} parent=1 // pred_region
      %s23 = ssub.s32 2048, 2048
      %24 = vsyncadd [#allocation6], %s23
      %s25 = sshll.u32 [#allocation5], 4
      %s26 = int_to_ptr.vmem [resolvable:$true] %s25
      %31 = dma.hbm_to_vmem [thread:$0]  %s1, 2048, %s26, [#allocation6], 128, 128, 8
    $region9: #{tpu_custom_call.1} parent=1 // pred_fallthru
      _
    // Predicated region
    $region10: #{tpu_custom_call.1} parent=1 // pred_check
      _
    $region11: #{tpu_custom_call.1} parent=1 // pred_check_branch
      %33 = sbr.rel (0) target = $region13
    $region12: #{tpu_custom_call.1} parent=1 // pred_region
      %34 = dma.done [#allocation3], 64
    $region13: #{tpu_custom_call.1} parent=1 // pred_fallthru
      _
    // Predicated region
    $region14: #{tpu_custom_call.1} parent=1 // pred_check
      _
    $region15: #{tpu_custom_call.1} parent=1 // pred_check_branch
      %36 = sbr.rel (0) target = $region17
    $region16: #{tpu_custom_call.1} parent=1 // pred_region
      %37 = dma.done [#allocation6], 2048
    $region17: #{tpu_custom_call.1} parent=1 // pred_fallthru
      _
    %v38 = vld [vmem:[#allocation2] sm:$0xf]
    %v39 = vld [vmem:[#allocation5] sm:$0xff]
    %v40 = vld [vmem:[#allocation5 + $0x8] sm:$0xff]
    %v41 = vld [vmem:[#allocation5 + $0x10] sm:$0xff]
    %v42 = vld [vmem:[#allocation5 + $0x18] sm:$0xff]
    %v43 = vld [vmem:[#allocation5 + $0x20] sm:$0xff]
    %v44 = vld [vmem:[#allocation5 + $0x28] sm:$0xff]
    %v45 = vld [vmem:[#allocation5 + $0x30] sm:$0xff]
    %v46 = vld [vmem:[#allocation5 + $0x38] sm:$0xff]
    %v47 = vld [vmem:[#allocation5 + $0x40] sm:$0xff]
    %v48 = vld [vmem:[#allocation5 + $0x48] sm:$0xff]
    %v49 = vld [vmem:[#allocation5 + $0x50] sm:$0xff]
    %v50 = vld [vmem:[#allocation5 + $0x58] sm:$0xff]
    %v51 = vld [vmem:[#allocation5 + $0x60] sm:$0xff]
    %v52 = vld [vmem:[#allocation5 + $0x68] sm:$0xff]
    %v53 = vld [vmem:[#allocation5 + $0x70] sm:$0xff]
    %v54 = vld [vmem:[#allocation5 + $0x78] sm:$0xff]
    %55 = vmatprep.subr.mxu0 0.0
    %56 = vmatpush1.msra.mxu0 %v39
    %57 = vmatprep.subr.mxu0 0.0
    %58 = vmatpush1.msra.mxu0 %v40
    %59 = vmatprep.subr.mxu0 0.0
    %60 = vmatpush1.msra.mxu0 %v41
    %61 = vmatprep.subr.mxu0 0.0
    %62 = vmatpush1.msra.mxu0 %v42
    %63 = vmatprep.subr.mxu0 0.0
    %64 = vmatpush1.msra.mxu0 %v43
    %65 = vmatprep.subr.mxu0 0.0
    %66 = vmatpush1.msra.mxu0 %v44
    %67 = vmatprep.subr.mxu0 0.0
    %68 = vmatpush1.msra.mxu0 %v45
    %69 = vmatprep.subr.mxu0 0.0
    %70 = vmatpush1.msra.mxu0 %v46
    %71 = vmatprep.subr.mxu0 0.0
    %72 = vmatpush1.msra.mxu0 %v47
    %73 = vmatprep.subr.mxu0 0.0
    %74 = vmatpush1.msra.mxu0 %v48
    %75 = vmatprep.subr.mxu0 0.0
    %76 = vmatpush1.msra.mxu0 %v49
    %77 = vmatprep.subr.mxu0 0.0
    %78 = vmatpush1.msra.mxu0 %v50
    %79 = vmatprep.subr.mxu0 0.0
    %80 = vmatpush1.msra.mxu0 %v51
    %81 = vmatprep.subr.mxu0 0.0
    %82 = vmatpush1.msra.mxu0 %v52
    %83 = vmatprep.subr.mxu0 0.0
    %84 = vmatpush1.msra.mxu0 %v53
    %85 = vmatprep.subr.mxu0 0.0
    %86 = vmatpush1.msra.mxu0 %v54
    %87 = vmatprep.subr.mxu0 0.0
    %88 = vmatpush1.msra.mxu0 0.0
    %89 = vmatprep.subr.mxu0 0.0
    %90 = vmatpush1.msra.mxu0 0.0
    %91 = vmatprep.subr.mxu0 0.0
    %92 = vmatpush1.msra.mxu0 0.0
    %93 = vmatprep.subr.mxu0 0.0
    %94 = vmatpush1.msra.mxu0 0.0
    %95 = vmatprep.subr.mxu0 0.0
    %96 = vmatpush1.msra.mxu0 0.0
    %97 = vmatprep.subr.mxu0 0.0
    %98 = vmatpush1.msra.mxu0 0.0
    %99 = vmatprep.subr.mxu0 0.0
    %100 = vmatpush1.msra.mxu0 0.0
    %101 = vmatprep.subr.mxu0 0.0
    %102 = vmatpush1.msra.mxu0 0.0
    %103 = vmatprep.subr.mxu0 0.0
    %104 = vmatpush1.msra.mxu0 0.0
    %105 = vmatprep.subr.mxu0 0.0
    %106 = vmatpush1.msra.mxu0 0.0
    %107 = vmatprep.subr.mxu0 0.0
    %108 = vmatpush1.msra.mxu0 0.0
    %109 = vmatprep.subr.mxu0 0.0
    %110 = vmatpush1.msra.mxu0 0.0
    %111 = vmatprep.subr.mxu0 0.0
    %112 = vmatpush1.msra.mxu0 0.0
    %113 = vmatprep.subr.mxu0 0.0
    %114 = vmatpush1.msra.mxu0 0.0
    %115 = vmatprep.subr.mxu0 0.0
    %116 = vmatpush1.msra.mxu0 0.0
    %117 = vmatprep.subr.mxu0 0.0
    %118 = vmatpush1.msra.mxu0 0.0
    %119 = vmatprep.mubr.f32.mxu0 0.0
    %120 = vmatmul.mubr.f32.gmra.mrb[0].mxu0 %v38
    %v121 = vpop.f32.mrb[0].mxu0
    %v122 = vadd.f32 0.0, %v121
    %v123 = vpop.f32.mrb[0].mxu0
    %124 = vdwg.mxu0
    %v125 = vmul.f32 %v122, 0.5
    %v126 = vtanh.pop %v125
    %v127 = vmul.f32 %v126, 0.5
    %v128 = vadd.f32 %v127, 0.5
    %v129 = vmul.f32 %v38, %v128
    %130 = vst [vmem:[#allocation7] sm:$0xf] %v129
    // Predicated region
    $region18: #{tpu_custom_call.1} parent=1 // pred_check
      _
    $region19: #{tpu_custom_call.1} parent=1 // pred_check_branch
      %132 = sbr.rel (0) target = $region21
    $region20: #{tpu_custom_call.1} parent=1 // pred_region
      %s134 = ssub.s32 64, 64
      %135 = vsyncadd [#allocation4], %s134
      %s137 = sshll.u32 [#allocation7], 4
      %s138 = int_to_ptr.vmem [resolvable:$true] %s137
      %140 = dma.vmem_to_hbm [thread:$0]  %s138, 64, %s2, [#allocation4]
    $region21: #{tpu_custom_call.1} parent=1 // pred_fallthru
      _
    // Predicated region
    $region22: #{tpu_custom_call.1} parent=1 // pred_check
      _
    $region23: #{tpu_custom_call.1} parent=1 // pred_check_branch
      %142 = sbr.rel (0) target = $region25
    $region24: #{tpu_custom_call.1} parent=1 // pred_region
      %143 = dma.done [#allocation4], 64
    $region25: #{tpu_custom_call.1} parent=1 // pred_fallthru
      _
    %144 = vsyncpa [#allocation3], 1
    %145 = vsyncpa [#allocation6], 1
    %146 = vsyncpa [#allocation4], 1

</llo_original>
